<compile_context>
chip_gen: v6e
topology: v6e:2x2x1
jax: 0.10.0
libtpu: 0.0.40
codegen_flags: <defaults>
</compile_context>

<pallas_src>
import functools
import math

import jax
import jax.numpy as jnp
from jax import lax
from jax.experimental import pallas as pl
from jax.experimental.pallas import tpu as pltpu


def _quantize_branch(h, cb, g, inv_temp):
    """One VQQuantizer branch (gumbel-softmax over -L2 distances).

    Returns (q [B, K], codes [2B, D]) where codes[:B] = c_hard and
    codes[B:] = c_tilde.
    """
    B, D = h.shape
    K = cb.shape[0]

    # -dist (mod per-row const) = 2 h.c - ||c||^2.  ||h||^2 is dropped: it is
    # constant per row, so softmax and argmax over K are unchanged.
    hc = lax.dot_general(h, cb, (((1,), (1,)), ((), ())),
                         preferred_element_type=jnp.float32)           # [B, K]
    # ||c||^2 computed directly lane-laid ([1, K]) via a ones-row contraction
    # (no relayout of a sublane-laid lane-reduction result).
    cb_sq = lax.dot_general(jnp.ones((1, D), jnp.float32), cb * cb,
                            (((1,), (1,)), ((), ())),
                            preferred_element_type=jnp.float32)        # [1, K]
    logits = (hc + hc - cb_sq + g) * inv_temp                          # [B, K]

    # Hard assignment straight from the logits (softmax is monotone, so the
    # argmax is identical); first-max tie-break matches torch.argmax.
    iota_k = lax.broadcasted_iota(jnp.int32, (B, K), 1)
    max_l = jnp.max(logits, axis=1, keepdims=True)                     # [B, 1]
    first_idx = jnp.min(jnp.where(logits == max_l, iota_k, K),
                        axis=1, keepdims=True)                         # [B, 1]
    one_hot = (iota_k == first_idx).astype(jnp.float32)                # [B, K]

    # Soft assignment (gumbel-softmax, hard=False), exact normalization.
    e = jnp.exp(logits - max_l)
    q = e / jnp.sum(e, axis=1, keepdims=True)                          # [B, K]

    # c_hard and c_tilde share the same RHS -> one MXU pass on a stacked LHS.
    lhs = jnp.concatenate([one_hot, q], axis=0)                        # [2B, K]
    codes = jnp.dot(lhs, cb, preferred_element_type=jnp.float32)       # [2B, D]
    return q, codes


def _dual_vq_kernel(h_tr_ref, h_re_ref, cb_tr_ref, cb_re_ref, g_tr_ref,
                    g_re_ref, codes_ref, q_tr_ref, q_re_ref, loss_ref,
                    *, temperature, beta):
    inv_t = jnp.float32(1.0 / temperature)
    h_tr = h_tr_ref[...]
    h_re = h_re_ref[...]
    B, D = h_tr.shape

    q_tr, codes_tr = _quantize_branch(h_tr, cb_tr_ref[...], g_tr_ref[...], inv_t)
    q_re, codes_re = _quantize_branch(h_re, cb_re_ref[...], g_re_ref[...], inv_t)

    # codebook_loss + beta * commitment_loss == (1 + beta) * mse(h, c_hard) in
    # forward value (the detach targets only differ for the backward pass).
    # Both branches are summed in-kernel -> single SMEM scalar.
    d_tr = h_tr - codes_tr[:B]
    d_re = h_re - codes_re[:B]
    loss_ref[0] = (jnp.sum(d_tr * d_tr) + jnp.sum(d_re * d_re)) * jnp.float32(
        (1.0 + beta) / (B * D))

    # One [4B, D] slab holds all code vectors (rows: hard_tr, tilde_tr,
    # hard_re, tilde_re); the fused matmul outputs are stored as-is.
    codes_ref[: 2 * B] = codes_tr
    codes_ref[2 * B:] = codes_re
    q_tr_ref[...] = q_tr
    q_re_ref[...] = q_re


@functools.partial(jax.jit, static_argnames=("beta", "temperature"))
def dual_vq_forward(h_tr, h_re, codebook_tr, codebook_re, g_tr, g_re,
                    *, beta=0.25, temperature=1.0):
    """DualVQQuantizer.forward with coupling=False (module default)."""
    B, D = h_tr.shape
    K_tr = codebook_tr.shape[0]
    K_re = codebook_re.shape[0]

    kernel = functools.partial(_dual_vq_kernel,
                               temperature=float(temperature),
                               beta=float(beta))

    vmem = pltpu.MemorySpace.VMEM
    smem = pltpu.MemorySpace.SMEM
    codes, q_tr, q_re, loss = pl.pallas_call(
        kernel,
        out_shape=(
            jax.ShapeDtypeStruct((4 * B, D), jnp.float32),   # hard/soft codes
            jax.ShapeDtypeStruct((B, K_tr), jnp.float32),    # q_tr
            jax.ShapeDtypeStruct((B, K_re), jnp.float32),    # q_re
            jax.ShapeDtypeStruct((1,), jnp.float32),         # total loss
        ),
        in_specs=[pl.BlockSpec(memory_space=vmem)] * 6,
        out_specs=(
            pl.BlockSpec(memory_space=vmem),
            pl.BlockSpec(memory_space=vmem),
            pl.BlockSpec(memory_space=vmem),
            pl.BlockSpec(memory_space=smem),
        ),
    )(h_tr, h_re, codebook_tr, codebook_re, g_tr, g_re)

    hard_tr, soft_tr = codes[0:B], codes[B:2 * B]
    hard_re, soft_re = codes[2 * B:3 * B], codes[3 * B:]

    # Straight-through output: forward value is exactly c_hard.
    # TODO(synk): straight-through / detach gradient routing (grad via c_tilde,
    # separate codebook/commitment detach targets) needs a custom_vjp; only the
    # forward pass is implemented here.
    # TODO(synk): coupling=True branch (Linear->SiLU->Linear + KL terms) not
    # implemented; module default is coupling=False.
    return {
        'q_tr': q_tr, 'soft_tr': soft_tr, 'hard_tr': hard_tr,
        'quantized_tr': hard_tr,
        'q_re': q_re, 'soft_re': soft_re, 'hard_re': hard_re,
        'quantized_re': hard_re,
        'loss': loss[0],
    }


def _kaiming_uniform_codebook(key, num_codes, code_dim):
    # torch.nn.init.kaiming_uniform_(w, a=sqrt(5)) on a [K, D] matrix:
    # fan_in = D, gain = 1/sqrt(3), bound = gain*sqrt(3/fan_in) = 1/sqrt(D).
    bound = 1.0 / math.sqrt(code_dim)
    return jax.random.uniform(key, (num_codes, code_dim),
                              dtype=jnp.float32, minval=-bound, maxval=bound)


if __name__ == "__main__":
    B, D = 8, 32          # batch, code_dim
    K_TR, K_RE = 16, 12   # num_codes_tr, num_codes_re
    BETA, TEMP = 0.25, 1.0

    root = jax.random.PRNGKey(0)
    k_htr, k_hre, k_cbtr, k_cbre, k_gtr, k_gre = jax.random.split(root, 6)

    h_tr = jax.random.normal(k_htr, (B, D), dtype=jnp.float32)
    h_re = jax.random.normal(k_hre, (B, D), dtype=jnp.float32)
    codebook_tr = _kaiming_uniform_codebook(k_cbtr, K_TR, D)
    codebook_re = _kaiming_uniform_codebook(k_cbre, K_RE, D)
    # Gumbel(0,1) noise for F.gumbel_softmax (torch's RNG is stateful; noise is
    # generated here in plain JAX and consumed inside the kernel).
    g_tr = jax.random.gumbel(k_gtr, (B, K_TR), dtype=jnp.float32)
    g_re = jax.random.gumbel(k_gre, (B, K_RE), dtype=jnp.float32)

    out = dual_vq_forward(h_tr, h_re, codebook_tr, codebook_re, g_tr, g_re,
                          beta=BETA, temperature=TEMP)
    out = jax.block_until_ready(out)

    # --- shape checks ---
    assert out['q_tr'].shape == (B, K_TR)
    assert out['q_re'].shape == (B, K_RE)
    assert out['soft_tr'].shape == (B, D) and out['hard_tr'].shape == (B, D)
    assert out['soft_re'].shape == (B, D) and out['hard_re'].shape == (B, D)
    assert out['quantized_tr'].shape == (B, D)
    assert out['quantized_re'].shape == (B, D)
    assert out['loss'].shape == ()

    hi = jax.lax.Precision.HIGHEST

    # q rows sum to 1 (exact normalization in-kernel).
    assert jnp.allclose(jnp.sum(out['q_tr'], axis=1), 1.0, atol=1e-4)
    assert jnp.allclose(jnp.sum(out['q_re'], axis=1), 1.0, atol=1e-4)

    # q matches the full gumbel-softmax reference (softmax is invariant to the
    # dropped ||h||^2 row constant); loose tol covers MXU operand precision.
    def ref_q(h, cb, g):
        h_sq = jnp.sum(h * h, axis=1, keepdims=True)
        cb_sq = jnp.sum(cb * cb, axis=1)
        dist = h_sq + cb_sq[None, :] - 2.0 * jnp.matmul(h, cb.T, precision=hi)
        return jax.nn.softmax((-dist + g) / TEMP, axis=1)
    assert jnp.allclose(out['q_tr'], ref_q(h_tr, codebook_tr, g_tr), atol=3e-2)
    assert jnp.allclose(out['q_re'], ref_q(h_re, codebook_re, g_re), atol=3e-2)

    # Hard code is the argmax codebook row (self-consistent with kernel q; FP
    # near-ties could legitimately differ from a reference argmax).
    idx_tr = jnp.argmax(out['q_tr'], axis=1)
    idx_re = jnp.argmax(out['q_re'], axis=1)
    assert jnp.allclose(out['hard_tr'], codebook_tr[idx_tr], atol=5e-3)
    assert jnp.allclose(out['hard_re'], codebook_re[idx_re], atol=5e-3)

    # Soft code equals q @ codebook.
    assert jnp.allclose(out['soft_tr'],
                        jnp.matmul(out['q_tr'], codebook_tr, precision=hi),
                        atol=5e-3)
    assert jnp.allclose(out['soft_re'],
                        jnp.matmul(out['q_re'], codebook_re, precision=hi),
                        atol=5e-3)

    # loss == (1 + beta) * (mse(h_tr, hard_tr) + mse(h_re, hard_re))
    ref_loss = ((1.0 + BETA) * jnp.mean((h_tr - out['hard_tr']) ** 2)
                + (1.0 + BETA) * jnp.mean((h_re - out['hard_re']) ** 2))
    assert jnp.allclose(out['loss'], ref_loss, atol=1e-4, rtol=1e-4)

    # Straight-through forward value is exactly c_hard.
    assert jnp.array_equal(out['quantized_tr'], out['hard_tr'])
    assert jnp.array_equal(out['quantized_re'], out['hard_re'])

    print("KERNEL_OK")
</pallas_src>

<mosaic_0001>
module attributes {stable_mosaic.version = 11 : i64} {
  func.func @_dual_vq_kernel(%arg0: memref<8x32xf32, #tpu.memory_space<vmem>>, %arg1: memref<8x32xf32, #tpu.memory_space<vmem>>, %arg2: memref<16x32xf32, #tpu.memory_space<vmem>>, %arg3: memref<12x32xf32, #tpu.memory_space<vmem>>, %arg4: memref<8x16xf32, #tpu.memory_space<vmem>>, %arg5: memref<8x12xf32, #tpu.memory_space<vmem>>, %arg6: memref<32x32xf32, #tpu.memory_space<vmem>>, %arg7: memref<8x16xf32, #tpu.memory_space<vmem>>, %arg8: memref<8x12xf32, #tpu.memory_space<vmem>>, %arg9: memref<1xf32, #tpu.memory_space<smem>>) attributes {dimension_semantics = [], scalar_prefetch = 0 : i64, scratch_operands = 0 : i64, tpu.core_type = #tpu.core_type<tc>} {
    %c0 = arith.constant 0 : index
    %c0_0 = arith.constant 0 : index
    %0 = vector.load %arg0[%c0, %c0_0] : memref<8x32xf32, #tpu.memory_space<vmem>>, vector<8x32xf32>
    %c0_1 = arith.constant 0 : index
    %c0_2 = arith.constant 0 : index
    %1 = vector.load %arg1[%c0_1, %c0_2] : memref<8x32xf32, #tpu.memory_space<vmem>>, vector<8x32xf32>
    %c0_3 = arith.constant 0 : index
    %c0_4 = arith.constant 0 : index
    %2 = vector.load %arg2[%c0_3, %c0_4] : memref<16x32xf32, #tpu.memory_space<vmem>>, vector<16x32xf32>
    %c0_5 = arith.constant 0 : index
    %c0_6 = arith.constant 0 : index
    %3 = vector.load %arg4[%c0_5, %c0_6] : memref<8x16xf32, #tpu.memory_space<vmem>>, vector<8x16xf32>
    %cst = arith.constant dense<0.000000e+00> : vector<8x16xf32>
    %4 = tpu.matmul %0, %2, %cst {dimension_numbers = #tpu.dot_dimension_numbers<[1], [1], [0], [0], [0, 0, 1, 0], [], []>} : vector<8x32xf32>, vector<16x32xf32>, vector<8x16xf32> -> vector<8x16xf32>
    %cst_7 = arith.constant 1.000000e+00 : f32
    %5 = vector.broadcast %cst_7 : f32 to vector<1x32xf32>
    %6 = arith.mulf %2, %2 : vector<16x32xf32>
    %cst_8 = arith.constant dense<0.000000e+00> : vector<1x16xf32>
    %7 = tpu.matmul %5, %6, %cst_8 {dimension_numbers = #tpu.dot_dimension_numbers<[1], [1], [0], [0], [0, 0, 1, 0], [], []>} : vector<1x32xf32>, vector<16x32xf32>, vector<1x16xf32> -> vector<1x16xf32>
    %8 = arith.addf %4, %4 : vector<8x16xf32>
    %9 = vector.broadcast %7 : vector<1x16xf32> to vector<8x16xf32>
    %10 = arith.subf %8, %9 : vector<8x16xf32>
    %11 = arith.addf %10, %3 : vector<8x16xf32>
    %cst_9 = arith.constant 1.000000e+00 : f32
    %12 = vector.broadcast %cst_9 : f32 to vector<8x16xf32>
    %13 = arith.mulf %11, %12 : vector<8x16xf32>
    %14 = tpu.iota {dimensions = array<i32: 1>} : vector<8x16xi32>
    %cst_10 = arith.constant dense<0xFF800000> : vector<8xf32>
    %15 = vector.multi_reduction <maximumf>, %13, %cst_10 [1] : vector<8x16xf32> to vector<8xf32>
    %16 = vector.shape_cast %15 : vector<8xf32> to vector<8x1xf32>
    %17 = vector.broadcast %16 : vector<8x1xf32> to vector<8x16xf32>
    %18 = arith.cmpf oeq, %13, %17 : vector<8x16xf32>
    %c16_i32 = arith.constant 16 : i32
    %19 = vector.broadcast %c16_i32 : i32 to vector<8x16xi32>
    %20 = arith.select %18, %14, %19 : vector<8x16xi1>, vector<8x16xi32>
    %cst_11 = arith.constant dense<2147483647> : vector<8xi32>
    %21 = vector.multi_reduction <minsi>, %20, %cst_11 [1] : vector<8x16xi32> to vector<8xi32>
    %22 = vector.shape_cast %21 : vector<8xi32> to vector<8x1xi32>
    %23 = vector.broadcast %22 : vector<8x1xi32> to vector<8x16xi32>
    %24 = arith.cmpi eq, %14, %23 : vector<8x16xi32>
    %25 = arith.extui %24 : vector<8x16xi1> to vector<8x16xi32>
    %26 = arith.sitofp %25 : vector<8x16xi32> to vector<8x16xf32>
    %27 = vector.broadcast %16 : vector<8x1xf32> to vector<8x16xf32>
    %28 = arith.subf %13, %27 : vector<8x16xf32>
    %29 = math.exp %28 : vector<8x16xf32>
    %cst_12 = arith.constant dense<0.000000e+00> : vector<8xf32>
    %30 = vector.multi_reduction <add>, %29, %cst_12 [1] : vector<8x16xf32> to vector<8xf32>
    %31 = vector.shape_cast %30 : vector<8xf32> to vector<8x1xf32>
    %32 = vector.broadcast %31 : vector<8x1xf32> to vector<8x16xf32>
    %33 = arith.divf %29, %32 : vector<8x16xf32>
    %34 = tpu.concatenate %26, %33 in 0 : vector<8x16xf32>, vector<8x16xf32> -> vector<16x16xf32>
    %cst_13 = arith.constant dense<0.000000e+00> : vector<16x32xf32>
    %35 = tpu.matmul %34, %2, %cst_13 {dimension_numbers = #tpu.dot_dimension_numbers<[1], [0], [0], [1], [0, 0, 1, 1], [], []>} : vector<16x16xf32>, vector<16x32xf32>, vector<16x32xf32> -> vector<16x32xf32>
    %c0_14 = arith.constant 0 : index
    %c0_15 = arith.constant 0 : index
    %36 = vector.load %arg3[%c0_14, %c0_15] : memref<12x32xf32, #tpu.memory_space<vmem>>, vector<12x32xf32>
    %c0_16 = arith.constant 0 : index
    %c0_17 = arith.constant 0 : index
    %37 = vector.load %arg5[%c0_16, %c0_17] : memref<8x12xf32, #tpu.memory_space<vmem>>, vector<8x12xf32>
    %cst_18 = arith.constant dense<0.000000e+00> : vector<8x12xf32>
    %38 = tpu.matmul %1, %36, %cst_18 {dimension_numbers = #tpu.dot_dimension_numbers<[1], [1], [0], [0], [0, 0, 1, 0], [], []>} : vector<8x32xf32>, vector<12x32xf32>, vector<8x12xf32> -> vector<8x12xf32>
    %cst_19 = arith.constant 1.000000e+00 : f32
    %39 = vector.broadcast %cst_19 : f32 to vector<1x32xf32>
    %40 = arith.mulf %36, %36 : vector<12x32xf32>
    %cst_20 = arith.constant dense<0.000000e+00> : vector<1x12xf32>
    %41 = tpu.matmul %39, %40, %cst_20 {dimension_numbers = #tpu.dot_dimension_numbers<[1], [1], [0], [0], [0, 0, 1, 0], [], []>} : vector<1x32xf32>, vector<12x32xf32>, vector<1x12xf32> -> vector<1x12xf32>
    %42 = arith.addf %38, %38 : vector<8x12xf32>
    %43 = vector.broadcast %41 : vector<1x12xf32> to vector<8x12xf32>
    %44 = arith.subf %42, %43 : vector<8x12xf32>
    %45 = arith.addf %44, %37 : vector<8x12xf32>
    %cst_21 = arith.constant 1.000000e+00 : f32
    %46 = vector.broadcast %cst_21 : f32 to vector<8x12xf32>
    %47 = arith.mulf %45, %46 : vector<8x12xf32>
    %48 = tpu.iota {dimensions = array<i32: 1>} : vector<8x12xi32>
    %cst_22 = arith.constant dense<0xFF800000> : vector<8xf32>
    %49 = vector.multi_reduction <maximumf>, %47, %cst_22 [1] : vector<8x12xf32> to vector<8xf32>
    %50 = vector.shape_cast %49 : vector<8xf32> to vector<8x1xf32>
    %51 = vector.broadcast %50 : vector<8x1xf32> to vector<8x12xf32>
    %52 = arith.cmpf oeq, %47, %51 : vector<8x12xf32>
    %c12_i32 = arith.constant 12 : i32
    %53 = vector.broadcast %c12_i32 : i32 to vector<8x12xi32>
    %54 = arith.select %52, %48, %53 : vector<8x12xi1>, vector<8x12xi32>
    %cst_23 = arith.constant dense<2147483647> : vector<8xi32>
    %55 = vector.multi_reduction <minsi>, %54, %cst_23 [1] : vector<8x12xi32> to vector<8xi32>
    %56 = vector.shape_cast %55 : vector<8xi32> to vector<8x1xi32>
    %57 = vector.broadcast %56 : vector<8x1xi32> to vector<8x12xi32>
    %58 = arith.cmpi eq, %48, %57 : vector<8x12xi32>
    %59 = arith.extui %58 : vector<8x12xi1> to vector<8x12xi32>
    %60 = arith.sitofp %59 : vector<8x12xi32> to vector<8x12xf32>
    %61 = vector.broadcast %50 : vector<8x1xf32> to vector<8x12xf32>
    %62 = arith.subf %47, %61 : vector<8x12xf32>
    %63 = math.exp %62 : vector<8x12xf32>
    %cst_24 = arith.constant dense<0.000000e+00> : vector<8xf32>
    %64 = vector.multi_reduction <add>, %63, %cst_24 [1] : vector<8x12xf32> to vector<8xf32>
    %65 = vector.shape_cast %64 : vector<8xf32> to vector<8x1xf32>
    %66 = vector.broadcast %65 : vector<8x1xf32> to vector<8x12xf32>
    %67 = arith.divf %63, %66 : vector<8x12xf32>
    %68 = tpu.concatenate %60, %67 in 0 : vector<8x12xf32>, vector<8x12xf32> -> vector<16x12xf32>
    %cst_25 = arith.constant dense<0.000000e+00> : vector<16x32xf32>
    %69 = tpu.matmul %68, %36, %cst_25 {dimension_numbers = #tpu.dot_dimension_numbers<[1], [0], [0], [1], [0, 0, 1, 1], [], []>} : vector<16x12xf32>, vector<12x32xf32>, vector<16x32xf32> -> vector<16x32xf32>
    %70 = vector.extract_strided_slice %35 {offsets = [0, 0], sizes = [8, 32], strides = [1, 1]} : vector<16x32xf32> to vector<8x32xf32>
    %71 = arith.subf %0, %70 : vector<8x32xf32>
    %72 = vector.extract_strided_slice %69 {offsets = [0, 0], sizes = [8, 32], strides = [1, 1]} : vector<16x32xf32> to vector<8x32xf32>
    %73 = arith.subf %1, %72 : vector<8x32xf32>
    %74 = arith.mulf %71, %71 : vector<8x32xf32>
    %75 = vector.shape_cast %74 : vector<8x32xf32> to vector<1x8x32xf32>
    %cst_26 = arith.constant dense<0.000000e+00> : vector<1xf32>
    %76 = vector.multi_reduction <add>, %75, %cst_26 [1, 2] : vector<1x8x32xf32> to vector<1xf32>
    %77 = vector.shape_cast %76 : vector<1xf32> to vector<1x1x1xf32>
    %78 = vector.extract %77[0, 0, 0] : f32 from vector<1x1x1xf32>
    %79 = arith.mulf %73, %73 : vector<8x32xf32>
    %80 = vector.shape_cast %79 : vector<8x32xf32> to vector<1x8x32xf32>
    %cst_27 = arith.constant dense<0.000000e+00> : vector<1xf32>
    %81 = vector.multi_reduction <add>, %80, %cst_27 [1, 2] : vector<1x8x32xf32> to vector<1xf32>
    %82 = vector.shape_cast %81 : vector<1xf32> to vector<1x1x1xf32>
    %83 = vector.extract %82[0, 0, 0] : f32 from vector<1x1x1xf32>
    %84 = arith.addf %78, %83 : f32
    %cst_28 = arith.constant 0.0048828125 : f32
    %85 = arith.mulf %84, %cst_28 : f32
    %c0_29 = arith.constant 0 : index
    %86 = memref.load %arg9[%c0_29] : memref<1xf32, #tpu.memory_space<smem>>
    memref.store %85, %arg9[%c0_29] : memref<1xf32, #tpu.memory_space<smem>>
    %c0_30 = arith.constant 0 : index
    %c0_31 = arith.constant 0 : index
    %87 = vector.load %arg6[%c0_30, %c0_31] : memref<32x32xf32, #tpu.memory_space<vmem>>, vector<16x32xf32>
    tpu.vector_store %arg6[%c0_30, %c0_31], %35 {strides = array<i32>} : memref<32x32xf32, #tpu.memory_space<vmem>>, vector<16x32xf32>,
    %c16 = arith.constant 16 : index
    %c0_32 = arith.constant 0 : index
    %88 = vector.load %arg6[%c16, %c0_32] : memref<32x32xf32, #tpu.memory_space<vmem>>, vector<16x32xf32>
    tpu.vector_store %arg6[%c16, %c0_32], %69 {strides = array<i32>} : memref<32x32xf32, #tpu.memory_space<vmem>>, vector<16x32xf32>,
    %c0_33 = arith.constant 0 : index
    %c0_34 = arith.constant 0 : index
    %89 = vector.load %arg7[%c0_33, %c0_34] : memref<8x16xf32, #tpu.memory_space<vmem>>, vector<8x16xf32>
    tpu.vector_store %arg7[%c0_33, %c0_34], %33 {strides = array<i32>} : memref<8x16xf32, #tpu.memory_space<vmem>>, vector<8x16xf32>,
    %c0_35 = arith.constant 0 : index
    %c0_36 = arith.constant 0 : index
    %90 = vector.load %arg8[%c0_35, %c0_36] : memref<8x12xf32, #tpu.memory_space<vmem>>, vector<8x12xf32>
    tpu.vector_store %arg8[%c0_35, %c0_36], %67 {strides = array<i32>} : memref<8x12xf32, #tpu.memory_space<vmem>>, vector<8x12xf32>,
    return
  }
}

</mosaic_0001>

<llo_original>
// kernel: dual_vq_forward.1
$region0: #{dual_vq_forward.1}
  #allocation0 [shape = 'u32[]', space=smem, size = 0x4, offset = 0x4, fixed_abs, tag = 'smem constant byte address 0x4 - core index']
  #allocation1 [shape = 'u32[144,128]{1,0:T(1,128)}', space=vmem, size = 0x12000, scoped, tag = 'internal scratch']
  %s0 = inlined_call_operand.hbm [shape: f32[8,32], index: 0, kind: input, shape index: {}]
  %s1 = inlined_call_operand.hbm [shape: f32[8,32], index: 1, kind: input, shape index: {}]
  %s2 = inlined_call_operand.hbm [shape: f32[16,32], index: 2, kind: input, shape index: {}]
  %s3 = inlined_call_operand.hbm [shape: f32[12,32], index: 3, kind: input, shape index: {}]
  %s4 = inlined_call_operand.hbm [shape: f32[8,16], index: 4, kind: input, shape index: {}]
  %s5 = inlined_call_operand.vmem [shape: f32[8,12], index: 5, kind: input, shape index: {}]
  %s6 = inlined_call_operand.vmem [shape: f32[32,32], index: 6, kind: output, shape index: {0}]
  %s7 = inlined_call_operand.hbm [shape: f32[8,16], index: 7, kind: output, shape index: {1}]
  %s8 = inlined_call_operand.hbm [shape: f32[8,12], index: 8, kind: output, shape index: {2}]
  %s9 = inlined_call_operand.hbm [shape: f32[1], index: 9, kind: output, shape index: {3}]
  %10 = xla_tuple %s6, %s7, %s8, %s9
  %s11 = sld [smem:[#allocation0]]
  $region78: #{dual_vq_forward.1} parent=0
    _
  %s13 = ssub.s32 1, %s11
  %s14 = scalar_select 0, %s13, %s11
  $region1: #{dual_vq_forward.1} parent=0
    #allocation2 [shape = 'u8[4096]{0}', space=vmem, size = 0x1000, scoped, tag = 'input window, operand 0, single buffered']
    #allocation3 [shape = 's32[1]{0}', space=sflag, size = 0x4, scoped, tag = 'scoped memory for dual_vq_forward.1']
    #allocation4 [shape = 's32[1]{0}', space=sflag, size = 0x4, scoped, tag = 'scoped memory for dual_vq_forward.1']
    #allocation5 [shape = 's32[1]{0}', space=sflag, size = 0x4, scoped, tag = 'scoped memory for dual_vq_forward.1']
    #allocation6 [shape = 'u8[4096]{0}', space=vmem, size = 0x1000, scoped, tag = 'input window, operand 1, single buffered']
    #allocation7 [shape = 's32[1]{0}', space=sflag, size = 0x4, scoped, tag = 'scoped memory for dual_vq_forward.1']
    #allocation8 [shape = 'u8[8192]{0}', space=vmem, size = 0x2000, scoped, tag = 'input window, operand 2, single buffered']
    #allocation9 [shape = 'u8[8192]{0}', space=vmem, size = 0x2000, scoped, tag = 'input window, operand 3, single buffered']
    #allocation10 [shape = 's32[1]{0}', space=sflag, size = 0x4, scoped, tag = 'scoped memory for dual_vq_forward.1']
    #allocation11 [shape = 'u8[4096]{0}', space=vmem, size = 0x1000, scoped, tag = 'input window, operand 4, single buffered']
    #allocation12 [shape = 'u8[4096]{0}', space=vmem, size = 0x1000, scoped, tag = 'output window, operand 1, single buffered']
    #allocation13 [shape = 'u8[4096]{0}', space=vmem, size = 0x1000, scoped, tag = 'output window, operand 2, single buffered']
    #allocation14 [shape = 's32[1]{0}', space=sflag, size = 0x4, scoped, tag = 'scoped memory for dual_vq_forward.1']
    #allocation15 [shape = 'u8[512]{0}', space=smem, size = 0x200, scoped, tag = 'output window, operand 3, single buffered']
    %15 = vsyncpa [#allocation3], 0
    %16 = vsyncpa [#allocation7], 0
    %17 = vsyncpa [#allocation10], 0
    %18 = vsyncpa [#allocation4], 0
    %19 = vsyncpa [#allocation14], 0
    %20 = vsyncpa [#allocation5], 0
    // Predicated region
    $region2: #{dual_vq_forward.1} parent=1 // pred_check
      _
    $region3: #{dual_vq_forward.1} parent=1 // pred_check_branch
      %22 = sbr.rel (0) target = $region5
    $region4: #{dual_vq_forward.1} parent=1 // pred_region
      %s24 = ssub.s32 128, 128
      %25 = vsyncadd [#allocation3], %s24
      %s27 = sshll.u32 [#allocation2], 4
      %s28 = int_to_ptr.vmem [resolvable:$true] %s27
      %30 = dma.hbm_to_vmem [thread:$0]  %s0, 128, %s28, [#allocation3]
    $region5: #{dual_vq_forward.1} parent=1 // pred_fallthru
      _
    // Predicated region
    $region6: #{dual_vq_forward.1} parent=1 // pred_check
      _
    $region7: #{dual_vq_forward.1} parent=1 // pred_check_branch
      %32 = sbr.rel (0) target = $region9
    $region8: #{dual_vq_forward.1} parent=1 // pred_region
      %s34 = ssub.s32 128, 128
      %35 = vsyncadd [#allocation7], %s34
      %s37 = sshll.u32 [#allocation6], 4
      %s38 = int_to_ptr.vmem [resolvable:$true] %s37
      %40 = dma.hbm_to_vmem [thread:$0]  %s1, 128, %s38, [#allocation7]
    $region9: #{dual_vq_forward.1} parent=1 // pred_fallthru
      _
    // Predicated region
    $region10: #{dual_vq_forward.1} parent=1 // pred_check
      _
    $region11: #{dual_vq_forward.1} parent=1 // pred_check_branch
      %42 = sbr.rel (0) target = $region13
    $region12: #{dual_vq_forward.1} parent=1 // pred_region
      %s44 = ssub.s32 256, 256
      %45 = vsyncadd [#allocation7], %s44
      %s46 = sshll.u32 [#allocation8], 4
      %s47 = int_to_ptr.vmem [resolvable:$true] %s46
      %52 = dma.hbm_to_vmem [thread:$0]  %s2, 256, %s47, [#allocation7], 128, 128, 8
    $region13: #{dual_vq_forward.1} parent=1 // pred_fallthru
      _
    // Predicated region
    $region14: #{dual_vq_forward.1} parent=1 // pred_check
      _
    $region15: #{dual_vq_forward.1} parent=1 // pred_check_branch
      %54 = sbr.rel (0) target = $region17
    $region16: #{dual_vq_forward.1} parent=1 // pred_region
      %s56 = ssub.s32 256, 256
      %57 = vsyncadd [#allocation10], %s56
      %s58 = sshll.u32 [#allocation9], 4
      %s59 = int_to_ptr.vmem [resolvable:$true] %s58
      %64 = dma.hbm_to_vmem [thread:$0]  %s3, 256, %s59, [#allocation10], 128, 128, 8
    $region17: #{dual_vq_forward.1} parent=1 // pred_fallthru
      _
    // Predicated region
    $region18: #{dual_vq_forward.1} parent=1 // pred_check
      _
    $region19: #{dual_vq_forward.1} parent=1 // pred_check_branch
      %66 = sbr.rel (0) target = $region21
    $region20: #{dual_vq_forward.1} parent=1 // pred_region
      %s68 = ssub.s32 128, 128
      %69 = vsyncadd [#allocation10], %s68
      %s71 = sshll.u32 [#allocation11], 4
      %s72 = int_to_ptr.vmem [resolvable:$true] %s71
      %74 = dma.hbm_to_vmem [thread:$0]  %s4, 128, %s72, [#allocation10]
    $region21: #{dual_vq_forward.1} parent=1 // pred_fallthru
      _
    // Predicated region
    $region22: #{dual_vq_forward.1} parent=1 // pred_check
      _
    $region23: #{dual_vq_forward.1} parent=1 // pred_check_branch
      %76 = sbr.rel (0) target = $region25
    $region24: #{dual_vq_forward.1} parent=1 // pred_region
      _
    $region25: #{dual_vq_forward.1} parent=1 // pred_fallthru
      _
    // Predicated region
    $region26: #{dual_vq_forward.1} parent=1 // pred_check
      _
    $region27: #{dual_vq_forward.1} parent=1 // pred_check_branch
      %78 = sbr.rel (0) target = $region29
    $region28: #{dual_vq_forward.1} parent=1 // pred_region
      %79 = dma.done [#allocation3], 128
    $region29: #{dual_vq_forward.1} parent=1 // pred_fallthru
      _
    // Predicated region
    $region30: #{dual_vq_forward.1} parent=1 // pred_check
      _
    $region31: #{dual_vq_forward.1} parent=1 // pred_check_branch
      %81 = sbr.rel (0) target = $region33
    $region32: #{dual_vq_forward.1} parent=1 // pred_region
      %82 = dma.done [#allocation7], 128
    $region33: #{dual_vq_forward.1} parent=1 // pred_fallthru
      _
    // Predicated region
    $region34: #{dual_vq_forward.1} parent=1 // pred_check
      _
    $region35: #{dual_vq_forward.1} parent=1 // pred_check_branch
      %84 = sbr.rel (0) target = $region37
    $region36: #{dual_vq_forward.1} parent=1 // pred_region
      %85 = dma.done [#allocation7], 256
    $region37: #{dual_vq_forward.1} parent=1 // pred_fallthru
      _
    // Predicated region
    $region38: #{dual_vq_forward.1} parent=1 // pred_check
      _
    $region39: #{dual_vq_forward.1} parent=1 // pred_check_branch
      %87 = sbr.rel (0) target = $region41
    $region40: #{dual_vq_forward.1} parent=1 // pred_region
      %88 = dma.done [#allocation10], 256
    $region41: #{dual_vq_forward.1} parent=1 // pred_fallthru
      _
    // Predicated region
    $region42: #{dual_vq_forward.1} parent=1 // pred_check
      _
    $region43: #{dual_vq_forward.1} parent=1 // pred_check_branch
      %90 = sbr.rel (0) target = $region45
    $region44: #{dual_vq_forward.1} parent=1 // pred_region
      %91 = dma.done [#allocation10], 128
    $region45: #{dual_vq_forward.1} parent=1 // pred_fallthru
      _
    %v92 = vld [vmem:[#allocation2] sm:$0xff]
    %v93 = vld [vmem:[#allocation6] sm:$0xff]
    %v94 = vld [vmem:[#allocation8] sm:$0xff]
    %v95 = vld [vmem:[#allocation8 + $0x8] sm:$0xff]
    %v96 = vld [vmem:[#allocation11] sm:$0xff]
    %vm97 = vcmask 261120
    %v99 = vsel %vm97, %v92, 0
    %v102 = vsel %vm97, %v94, 0
    %v105 = vsel %vm97, %v95, 0
    %107 = vmatprep.subr.mxu0 0.0
    %108 = vmatpush1.xpose.msra.mxu0 0.0
    %109 = vmatprep.subr.mxu0 0.0
    %110 = vmatpush1.xpose.msra.mxu0 0.0
    %111 = vmatprep.subr.mxu0 0.0
    %112 = vmatpush1.xpose.msra.mxu0 0.0
    %113 = vmatprep.subr.mxu0 0.0
    %114 = vmatpush1.xpose.msra.mxu0 0.0
    %115 = vmatprep.subr.mxu0 0.0
    %116 = vmatpush1.xpose.msra.mxu0 0.0
    %117 = vmatprep.subr.mxu0 0.0
    %118 = vmatpush1.xpose.msra.mxu0 0.0
    %119 = vmatprep.subr.mxu0 0.0
    %120 = vmatpush1.xpose.msra.mxu0 0.0
    %121 = vmatprep.subr.mxu0 0.0
    %122 = vmatpush1.xpose.msra.mxu0 0.0
    %123 = vmatprep.subr.mxu0 0.0
    %124 = vmatpush1.xpose.msra.mxu0 0.0
    %125 = vmatprep.subr.mxu0 0.0
    %126 = vmatpush1.xpose.msra.mxu0 0.0
    %127 = vmatprep.subr.mxu0 0.0
    %128 = vmatpush1.xpose.msra.mxu0 0.0
    %129 = vmatprep.subr.mxu0 0.0
    %130 = vmatpush1.xpose.msra.mxu0 0.0
    %131 = vmatprep.subr.mxu0 0.0
    %132 = vmatpush1.xpose.msra.mxu0 0.0
    %133 = vmatprep.subr.mxu0 0.0
    %134 = vmatpush1.xpose.msra.mxu0 0.0
    %135 = vmatprep.subr.mxu0 0.0
    %136 = vmatpush1.xpose.msra.mxu0 %v105
    %137 = vmatprep.subr.mxu0 0.0
    %138 = vmatpush1.xpose.msra.mxu0 %v102
    %139 = vmatprep.subr.mxu0 0.0
    %140 = vmatpush2.xpose.msra.mxu0 0.0
    %141 = vmatprep.subr.mxu0 0.0
    %142 = vmatpush2.xpose.msra.mxu0 0.0
    %143 = vmatprep.subr.mxu0 0.0
    %144 = vmatpush2.xpose.msra.mxu0 0.0
    %145 = vmatprep.subr.mxu0 0.0
    %146 = vmatpush2.xpose.msra.mxu0 0.0
    %147 = vmatprep.subr.mxu0 0.0
    %148 = vmatpush2.xpose.msra.mxu0 0.0
    %149 = vmatprep.subr.mxu0 0.0
    %150 = vmatpush2.xpose.msra.mxu0 0.0
    %151 = vmatprep.subr.mxu0 0.0
    %152 = vmatpush2.xpose.msra.mxu0 0.0
    %153 = vmatprep.subr.mxu0 0.0
    %154 = vmatpush2.xpose.msra.mxu0 0.0
    %155 = vmatprep.subr.mxu0 0.0
    %156 = vmatpush2.xpose.msra.mxu0 0.0
    %157 = vmatprep.subr.mxu0 0.0
    %158 = vmatpush2.xpose.msra.mxu0 0.0
    %159 = vmatprep.subr.mxu0 0.0
    %160 = vmatpush2.xpose.msra.mxu0 0.0
    %161 = vmatprep.subr.mxu0 0.0
    %162 = vmatpush2.xpose.msra.mxu0 0.0
    %163 = vmatprep.subr.mxu0 0.0
    %164 = vmatpush2.xpose.msra.mxu0 0.0
    %165 = vmatprep.subr.mxu0 0.0
    %166 = vmatpush2.xpose.msra.mxu0 0.0
    %167 = vmatprep.subr.mxu0 0.0
    %168 = vmatpush2.xpose.msra.mxu0 0.0
    %169 = vmatprep.subr.mxu0 0.0
    %170 = vmatpush2.xpose.msra.mxu0 0.0
    %171 = vmatprep.mubr.f32.mxu0 0.0
    %172 = vmatmul.mubr.f32.gmra.mxu0 %v99
    %v173 = vpop.f32.mrf.mxu0
    %v174 = vadd.f32 0.0, %v173
    %v175 = vpop.f32.mrf.mxu0
    %176 = vdwg.mxu0
    %v177 = vmul.f32 %v94, %v94
    %v178 = vmul.f32 %v95, %v95
    %v180 = vsel %vm97, 1.0, 0
    %v183 = vsel %vm97, %v177, 0
    %v186 = vsel %vm97, %v178, 0
    %188 = vmatprep.subr.mxu0 0.0
    %189 = vmatpush1.xpose.msra.mxu0 0.0
    %190 = vmatprep.subr.mxu0 0.0
    %191 = vmatpush1.xpose.msra.mxu0 0.0
    %192 = vmatprep.subr.mxu0 0.0
    %193 = vmatpush1.xpose.msra.mxu0 0.0
    %194 = vmatprep.subr.mxu0 0.0
    %195 = vmatpush1.xpose.msra.mxu0 0.0
    %196 = vmatprep.subr.mxu0 0.0
    %197 = vmatpush1.xpose.msra.mxu0 0.0
    %198 = vmatprep.subr.mxu0 0.0
    %199 = vmatpush1.xpose.msra.mxu0 0.0
    %200 = vmatprep.subr.mxu0 0.0
    %201 = vmatpush1.xpose.msra.mxu0 0.0
    %202 = vmatprep.subr.mxu0 0.0
    %203 = vmatpush1.xpose.msra.mxu0 0.0
    %204 = vmatprep.subr.mxu0 0.0
    %205 = vmatpush1.xpose.msra.mxu0 0.0
    %206 = vmatprep.subr.mxu0 0.0
    %207 = vmatpush1.xpose.msra.mxu0 0.0
    %208 = vmatprep.subr.mxu0 0.0
    %209 = vmatpush1.xpose.msra.mxu0 0.0
    %210 = vmatprep.subr.mxu0 0.0
    %211 = vmatpush1.xpose.msra.mxu0 0.0
    %212 = vmatprep.subr.mxu0 0.0
    %213 = vmatpush1.xpose.msra.mxu0 0.0
    %214 = vmatprep.subr.mxu0 0.0
    %215 = vmatpush1.xpose.msra.mxu0 0.0
    %216 = vmatprep.subr.mxu0 0.0
    %217 = vmatpush1.xpose.msra.mxu0 %v186
    %218 = vmatprep.subr.mxu0 0.0
    %219 = vmatpush1.xpose.msra.mxu0 %v183
    %220 = vmatprep.subr.mxu0 0.0
    %221 = vmatpush2.xpose.msra.mxu0 0.0
    %222 = vmatprep.subr.mxu0 0.0
    %223 = vmatpush2.xpose.msra.mxu0 0.0
    %224 = vmatprep.subr.mxu0 0.0
    %225 = vmatpush2.xpose.msra.mxu0 0.0
    %226 = vmatprep.subr.mxu0 0.0
    %227 = vmatpush2.xpose.msra.mxu0 0.0
    %228 = vmatprep.subr.mxu0 0.0
    %229 = vmatpush2.xpose.msra.mxu0 0.0
    %230 = vmatprep.subr.mxu0 0.0
    %231 = vmatpush2.xpose.msra.mxu0 0.0
    %232 = vmatprep.subr.mxu0 0.0
    %233 = vmatpush2.xpose.msra.mxu0 0.0
    %234 = vmatprep.subr.mxu0 0.0
    %235 = vmatpush2.xpose.msra.mxu0 0.0
    %236 = vmatprep.subr.mxu0 0.0
    %237 = vmatpush2.xpose.msra.mxu0 0.0
    %238 = vmatprep.subr.mxu0 0.0
    %239 = vmatpush2.xpose.msra.mxu0 0.0
    %240 = vmatprep.subr.mxu0 0.0
    %241 = vmatpush2.xpose.msra.mxu0 0.0
    %242 = vmatprep.subr.mxu0 0.0
    %243 = vmatpush2.xpose.msra.mxu0 0.0
    %244 = vmatprep.subr.mxu0 0.0
    %245 = vmatpush2.xpose.msra.mxu0 0.0
    %246 = vmatprep.subr.mxu0 0.0
    %247 = vmatpush2.xpose.msra.mxu0 0.0
    %248 = vmatprep.subr.mxu0 0.0
    %249 = vmatpush2.xpose.msra.mxu0 0.0
    %250 = vmatprep.subr.mxu0 0.0
    %251 = vmatpush2.xpose.msra.mxu0 0.0
    %252 = vmatprep.mubr.f32.mxu0 0.0
    %253 = vmatmul.mubr.f32.gmra.mxu0 %v180
    %v254 = vpop.f32.mrf.mxu0
    %v255 = vadd.f32 0.0, %v254
    %v256 = vpop.f32.mrf.mxu0
    %257 = vdwg.mxu0
    %v258 = vadd.f32 %v174, %v174
    %v259 = vlaneseq
    %v260 = vshrl.u32 %v259, 7
    %v261 = vsub.s32 0, %v260
    %v262 = vrot.slane %v255, %v261
    %v263 = vsub.f32 %v258, %v262
    %v264 = vadd.f32 %v263, %v96
    %v265 = vlaneseq
    %v266 = vand.u32 %v265, 127
    %vm267 = vcmask 130048
    %v268 = vsel %vm267, %v264, -inf
    %269 = vmax.xlane.f32.xlu0 %v268
    %v270 = vpop.xlane.xlu0 %269
    %vm271 = vcmp.eq.f32.partialorder %v264, %v270
    %v272 = vsel %vm271, %v266, 16
    %v273 = vsel %vm267, %v272, 2147483647
    %v274 = vand.u32 %v273, 65535
    %v275 = vshra.s32 %v273, 16
    %v276 = vcvt.s32.f32 %v274
    %v277 = vcvt.s32.f32 %v275
    %278 = vmin.xlane.f32.xlu0 %v277
    %v279 = vpop.xlane.xlu0 %278
    %vm280 = vcmp.eq.f32.partialorder %v277, %v279
    %v281 = vsel %vm280, %v276, inf
    %282 = vmin.xlane.f32.xlu0 %v281
    %v283 = vpop.xlane.xlu0 %282
    %v284 = vcvt.f32.s32 %v283
    %v285 = vcvt.f32.s32 %v279
    %v286 = vshll.u32 %v285, 16
    %v287 = vadd.s32 %v286, %v284
    %vm288 = vcmp.eq.s32.totalorder %v266, %v287
    %v289 = vsel %vm288, 1, 0
    %v290 = vcvt.s32.f32 %v289
    %v291 = vsub.f32 %v264, %v270
    %v292 = vmul.f32 %v291, 1.442695
    %v293 = vpow.pop %v292
    %v294 = vsel %vm267, %v293, 0.0
    %295 = vadd.xlane.f32.xlu0 %v294
    %v296 = vpop.xlane.xlu0 %295
    %v297 = vrcp.pop %v296
    %v298 = vmul.f32 %v293, %v297
    %v300 = vsel %vm267, %v290, 0
    %v303 = vsel %vm267, %v298, 0
    %305 = vmatprep.subr.mxu0 0.0
    %306 = vmatpush1.msra.mxu0 0.0
    %307 = vmatprep.subr.mxu0 0.0
    %308 = vmatpush1.msra.mxu0 0.0
    %309 = vmatprep.subr.mxu0 0.0
    %310 = vmatpush1.msra.mxu0 0.0
    %311 = vmatprep.subr.mxu0 0.0
    %312 = vmatpush1.msra.mxu0 0.0
    %313 = vmatprep.subr.mxu0 0.0
    %314 = vmatpush1.msra.mxu0 0.0
    %315 = vmatprep.subr.mxu0 0.0
    %316 = vmatpush1.msra.mxu0 0.0
    %317 = vmatprep.subr.mxu0 0.0
    %318 = vmatpush1.msra.mxu0 0.0
    %319 = vmatprep.subr.mxu0 0.0
    %320 = vmatpush1.msra.mxu0 0.0
    %321 = vmatprep.subr.mxu0 0.0
    %322 = vmatpush1.msra.mxu0 0.0
    %323 = vmatprep.subr.mxu0 0.0
    %324 = vmatpush1.msra.mxu0 0.0
    %325 = vmatprep.subr.mxu0 0.0
    %326 = vmatpush1.msra.mxu0 0.0
    %327 = vmatprep.subr.mxu0 0.0
    %328 = vmatpush1.msra.mxu0 0.0
    %329 = vmatprep.subr.mxu0 0.0
    %330 = vmatpush1.msra.mxu0 0.0
    %331 = vmatprep.subr.mxu0 0.0
    %332 = vmatpush1.msra.mxu0 0.0
    %333 = vmatprep.subr.mxu0 0.0
    %334 = vmatpush1.msra.mxu0 %v95
    %335 = vmatprep.subr.mxu0 0.0
    %336 = vmatpush1.msra.mxu0 %v94
    %337 = vmatprep.subr.mxu0 0.0
    %338 = vmatpush2.msra.mxu0 0.0
    %339 = vmatprep.subr.mxu0 0.0
    %340 = vmatpush2.msra.mxu0 0.0
    %341 = vmatprep.subr.mxu0 0.0
    %342 = vmatpush2.msra.mxu0 0.0
    %343 = vmatprep.subr.mxu0 0.0
    %344 = vmatpush2.msra.mxu0 0.0
    %345 = vmatprep.subr.mxu0 0.0
    %346 = vmatpush2.msra.mxu0 0.0
    %347 = vmatprep.subr.mxu0 0.0
    %348 = vmatpush2.msra.mxu0 0.0
    %349 = vmatprep.subr.mxu0 0.0
    %350 = vmatpush2.msra.mxu0 0.0
    %351 = vmatprep.subr.mxu0 0.0
    %352 = vmatpush2.msra.mxu0 0.0
    %353 = vmatprep.subr.mxu0 0.0
    %354 = vmatpush2.msra.mxu0 0.0
    %355 = vmatprep.subr.mxu0 0.0
    %356 = vmatpush2.msra.mxu0 0.0
    %357 = vmatprep.subr.mxu0 0.0
    %358 = vmatpush2.msra.mxu0 0.0
    %359 = vmatprep.subr.mxu0 0.0
    %360 = vmatpush2.msra.mxu0 0.0
    %361 = vmatprep.subr.mxu0 0.0
    %362 = vmatpush2.msra.mxu0 0.0
    %363 = vmatprep.subr.mxu0 0.0
    %364 = vmatpush2.msra.mxu0 0.0
    %365 = vmatprep.subr.mxu0 0.0
    %366 = vmatpush2.msra.mxu0 0.0
    %367 = vmatprep.subr.mxu0 0.0
    %368 = vmatpush2.msra.mxu0 0.0
    %369 = vmatprep.mubr.f32.mxu0 0.0
    %370 = vmatmul.mubr.f32.gmra.mxu0 %v300
    %v371 = vpop.f32.mrf.mxu0
    %v372 = vadd.f32 0.0, %v371
    %v373 = vpop.f32.mrf.mxu0
    %374 = vmatprep.mubr.f32.mxu0 0.0
    %375 = vmatmul.mubr.f32.gmra.mxu0 %v303
    %v376 = vpop.f32.mrf.mxu0
    %v377 = vadd.f32 0.0, %v376
    %v378 = vpop.f32.mrf.mxu0
    %379 = vdwg.mxu0
    %v380 = vld [vmem:[#allocation9] sm:$0xff]
    %v381 = vld [vmem:[#allocation9 + $0x8] sm:$0xf]
    %v382 = vld [vmem:[%s5] sm:$0xff]
    %v384 = vsel %vm97, %v93, 0
    %v387 = vsel %vm97, %v380, 0
    %v390 = vsel %vm97, %v381, 0
    %392 = vmatprep.subr.mxu0 0.0
    %393 = vmatpush1.xpose.msra.mxu0 0.0
    %394 = vmatprep.subr.mxu0 0.0
    %395 = vmatpush1.xpose.msra.mxu0 0.0
    %396 = vmatprep.subr.mxu0 0.0
    %397 = vmatpush1.xpose.msra.mxu0 0.0
    %398 = vmatprep.subr.mxu0 0.0
    %399 = vmatpush1.xpose.msra.mxu0 0.0
    %400 = vmatprep.subr.mxu0 0.0
    %401 = vmatpush1.xpose.msra.mxu0 0.0
    %402 = vmatprep.subr.mxu0 0.0
    %403 = vmatpush1.xpose.msra.mxu0 0.0
    %404 = vmatprep.subr.mxu0 0.0
    %405 = vmatpush1.xpose.msra.mxu0 0.0
    %406 = vmatprep.subr.mxu0 0.0
    %407 = vmatpush1.xpose.msra.mxu0 0.0
    %408 = vmatprep.subr.mxu0 0.0
    %409 = vmatpush1.xpose.msra.mxu0 0.0
    %410 = vmatprep.subr.mxu0 0.0
    %411 = vmatpush1.xpose.msra.mxu0 0.0
    %412 = vmatprep.subr.mxu0 0.0
    %413 = vmatpush1.xpose.msra.mxu0 0.0
    %414 = vmatprep.subr.mxu0 0.0
    %415 = vmatpush1.xpose.msra.mxu0 0.0
    %416 = vmatprep.subr.mxu0 0.0
    %417 = vmatpush1.xpose.msra.mxu0 0.0
    %418 = vmatprep.subr.mxu0 0.0
    %419 = vmatpush1.xpose.msra.mxu0 0.0
    %420 = vmatprep.subr.mxu0 0.0
    %421 = vmatpush1.xpose.msra.mxu0 %v390
    %422 = vmatprep.subr.mxu0 0.0
    %423 = vmatpush1.xpose.msra.mxu0 %v387
    %424 = vmatprep.subr.mxu0 0.0
    %425 = vmatpush2.xpose.msra.mxu0 0.0
    %426 = vmatprep.subr.mxu0 0.0
    %427 = vmatpush2.xpose.msra.mxu0 0.0
    %428 = vmatprep.subr.mxu0 0.0
    %429 = vmatpush2.xpose.msra.mxu0 0.0
    %430 = vmatprep.subr.mxu0 0.0
    %431 = vmatpush2.xpose.msra.mxu0 0.0
    %432 = vmatprep.subr.mxu0 0.0
    %433 = vmatpush2.xpose.msra.mxu0 0.0
    %434 = vmatprep.subr.mxu0 0.0
    %435 = vmatpush2.xpose.msra.mxu0 0.0
    %436 = vmatprep.subr.mxu0 0.0
    %437 = vmatpush2.xpose.msra.mxu0 0.0
    %438 = vmatprep.subr.mxu0 0.0
    %439 = vmatpush2.xpose.msra.mxu0 0.0
    %440 = vmatprep.subr.mxu0 0.0
    %441 = vmatpush2.xpose.msra.mxu0 0.0
    %442 = vmatprep.subr.mxu0 0.0
    %443 = vmatpush2.xpose.msra.mxu0 0.0
    %444 = vmatprep.subr.mxu0 0.0
    %445 = vmatpush2.xpose.msra.mxu0 0.0
    %446 = vmatprep.subr.mxu0 0.0
    %447 = vmatpush2.xpose.msra.mxu0 0.0
    %448 = vmatprep.subr.mxu0 0.0
    %449 = vmatpush2.xpose.msra.mxu0 0.0
    %450 = vmatprep.subr.mxu0 0.0
    %451 = vmatpush2.xpose.msra.mxu0 0.0
    %452 = vmatprep.subr.mxu0 0.0
    %453 = vmatpush2.xpose.msra.mxu0 0.0
    %454 = vmatprep.subr.mxu0 0.0
    %455 = vmatpush2.xpose.msra.mxu0 0.0
    %456 = vmatprep.mubr.f32.mxu0 0.0
    %457 = vmatmul.mubr.f32.gmra.mxu0 %v384
    %v458 = vpop.f32.mrf.mxu0
    %v459 = vadd.f32 0.0, %v458
    %v460 = vpop.f32.mrf.mxu0
    %461 = vdwg.mxu0
    %v462 = vmul.f32 %v380, %v380
    %v463 = vmul.f32 %v381, %v381
    %v465 = vsel %vm97, %v462, 0
    %v468 = vsel %vm97, %v463, 0
    %470 = vmatprep.subr.mxu0 0.0
    %471 = vmatpush1.xpose.msra.mxu0 0.0
    %472 = vmatprep.subr.mxu0 0.0
    %473 = vmatpush1.xpose.msra.mxu0 0.0
    %474 = vmatprep.subr.mxu0 0.0
    %475 = vmatpush1.xpose.msra.mxu0 0.0
    %476 = vmatprep.subr.mxu0 0.0
    %477 = vmatpush1.xpose.msra.mxu0 0.0
    %478 = vmatprep.subr.mxu0 0.0
    %479 = vmatpush1.xpose.msra.mxu0 0.0
    %480 = vmatprep.subr.mxu0 0.0
    %481 = vmatpush1.xpose.msra.mxu0 0.0
    %482 = vmatprep.subr.mxu0 0.0
    %483 = vmatpush1.xpose.msra.mxu0 0.0
    %484 = vmatprep.subr.mxu0 0.0
    %485 = vmatpush1.xpose.msra.mxu0 0.0
    %486 = vmatprep.subr.mxu0 0.0
    %487 = vmatpush1.xpose.msra.mxu0 0.0
    %488 = vmatprep.subr.mxu0 0.0
    %489 = vmatpush1.xpose.msra.mxu0 0.0
    %490 = vmatprep.subr.mxu0 0.0
    %491 = vmatpush1.xpose.msra.mxu0 0.0
    %492 = vmatprep.subr.mxu0 0.0
    %493 = vmatpush1.xpose.msra.mxu0 0.0
    %494 = vmatprep.subr.mxu0 0.0
    %495 = vmatpush1.xpose.msra.mxu0 0.0
    %496 = vmatprep.subr.mxu0 0.0
    %497 = vmatpush1.xpose.msra.mxu0 0.0
    %498 = vmatprep.subr.mxu0 0.0
    %499 = vmatpush1.xpose.msra.mxu0 %v468
    %500 = vmatprep.subr.mxu0 0.0
    %501 = vmatpush1.xpose.msra.mxu0 %v465
    %502 = vmatprep.subr.mxu0 0.0
    %503 = vmatpush2.xpose.msra.mxu0 0.0
    %504 = vmatprep.subr.mxu0 0.0
    %505 = vmatpush2.xpose.msra.mxu0 0.0
    %506 = vmatprep.subr.mxu0 0.0
    %507 = vmatpush2.xpose.msra.mxu0 0.0
    %508 = vmatprep.subr.mxu0 0.0
    %509 = vmatpush2.xpose.msra.mxu0 0.0
    %510 = vmatprep.subr.mxu0 0.0
    %511 = vmatpush2.xpose.msra.mxu0 0.0
    %512 = vmatprep.subr.mxu0 0.0
    %513 = vmatpush2.xpose.msra.mxu0 0.0
    %514 = vmatprep.subr.mxu0 0.0
    %515 = vmatpush2.xpose.msra.mxu0 0.0
    %516 = vmatprep.subr.mxu0 0.0
    %517 = vmatpush2.xpose.msra.mxu0 0.0
    %518 = vmatprep.subr.mxu0 0.0
    %519 = vmatpush2.xpose.msra.mxu0 0.0
    %520 = vmatprep.subr.mxu0 0.0
    %521 = vmatpush2.xpose.msra.mxu0 0.0
    %522 = vmatprep.subr.mxu0 0.0
    %523 = vmatpush2.xpose.msra.mxu0 0.0
    %524 = vmatprep.subr.mxu0 0.0
    %525 = vmatpush2.xpose.msra.mxu0 0.0
    %526 = vmatprep.subr.mxu0 0.0
    %527 = vmatpush2.xpose.msra.mxu0 0.0
    %528 = vmatprep.subr.mxu0 0.0
    %529 = vmatpush2.xpose.msra.mxu0 0.0
    %530 = vmatprep.subr.mxu0 0.0
    %531 = vmatpush2.xpose.msra.mxu0 0.0
    %532 = vmatprep.subr.mxu0 0.0
    %533 = vmatpush2.xpose.msra.mxu0 0.0
    %534 = vmatprep.mubr.f32.mxu0 0.0
    %535 = vmatmul.mubr.f32.gmra.mxu0 %v180
    %v536 = vpop.f32.mrf.mxu0
    %v537 = vadd.f32 0.0, %v536
    %v538 = vpop.f32.mrf.mxu0
    %539 = vdwg.mxu0
    %v540 = vadd.f32 %v459, %v459
    %v541 = vlaneseq
    %v542 = vshrl.u32 %v541, 7
    %v543 = vsub.s32 0, %v542
    %v544 = vrot.slane %v537, %v543
    %v545 = vsub.f32 %v540, %v544
    %v546 = vadd.f32 %v545, %v382
    %vm547 = vcmask 97280
    %v548 = vsel %vm547, %v546, -inf
    %549 = vmax.xlane.f32.xlu0 %v548
    %v550 = vpop.xlane.xlu0 %549
    %vm551 = vcmp.eq.f32.partialorder %v546, %v550
    %v552 = vsel %vm551, %v266, 12
    %v553 = vsel %vm547, %v552, 2147483647
    %v554 = vand.u32 %v553, 65535
    %v555 = vshra.s32 %v553, 16
    %v556 = vcvt.s32.f32 %v554
    %v557 = vcvt.s32.f32 %v555
    %558 = vmin.xlane.f32.xlu0 %v557
    %v559 = vpop.xlane.xlu0 %558
    %vm560 = vcmp.eq.f32.partialorder %v557, %v559
    %v561 = vsel %vm560, %v556, inf
    %562 = vmin.xlane.f32.xlu0 %v561
    %v563 = vpop.xlane.xlu0 %562
    %v564 = vcvt.f32.s32 %v563
    %v565 = vcvt.f32.s32 %v559
    %v566 = vshll.u32 %v565, 16
    %v567 = vadd.s32 %v566, %v564
    %vm568 = vcmp.eq.s32.totalorder %v266, %v567
    %v569 = vsel %vm568, 1, 0
    %v570 = vcvt.s32.f32 %v569
    %v571 = vsub.f32 %v546, %v550
    %v572 = vmul.f32 %v571, 1.442695
    %v573 = vpow.pop %v572
    %v574 = vsel %vm547, %v573, 0.0
    %575 = vadd.xlane.f32.xlu0 %v574
    %v576 = vpop.xlane.xlu0 %575
    %v577 = vrcp.pop %v576
    %v578 = vmul.f32 %v573, %v577
    %v580 = vsel %vm547, %v570, 0
    %v583 = vsel %vm547, %v578, 0
    %vm585 = vcmask 1043456
    %v586 = vsel %vm585, %v381, 0
    %588 = vmatprep.subr.mxu0 0.0
    %589 = vmatpush1.msra.mxu0 0.0
    %590 = vmatprep.subr.mxu0 0.0
    %591 = vmatpush1.msra.mxu0 0.0
    %592 = vmatprep.subr.mxu0 0.0
    %593 = vmatpush1.msra.mxu0 0.0
    %594 = vmatprep.subr.mxu0 0.0
    %595 = vmatpush1.msra.mxu0 0.0
    %596 = vmatprep.subr.mxu0 0.0
    %597 = vmatpush1.msra.mxu0 0.0
    %598 = vmatprep.subr.mxu0 0.0
    %599 = vmatpush1.msra.mxu0 0.0
    %600 = vmatprep.subr.mxu0 0.0
    %601 = vmatpush1.msra.mxu0 0.0
    %602 = vmatprep.subr.mxu0 0.0
    %603 = vmatpush1.msra.mxu0 0.0
    %604 = vmatprep.subr.mxu0 0.0
    %605 = vmatpush1.msra.mxu0 0.0
    %606 = vmatprep.subr.mxu0 0.0
    %607 = vmatpush1.msra.mxu0 0.0
    %608 = vmatprep.subr.mxu0 0.0
    %609 = vmatpush1.msra.mxu0 0.0
    %610 = vmatprep.subr.mxu0 0.0
    %611 = vmatpush1.msra.mxu0 0.0
    %612 = vmatprep.subr.mxu0 0.0
    %613 = vmatpush1.msra.mxu0 0.0
    %614 = vmatprep.subr.mxu0 0.0
    %615 = vmatpush1.msra.mxu0 0.0
    %616 = vmatprep.subr.mxu0 0.0
    %617 = vmatpush1.msra.mxu0 %v586
    %618 = vmatprep.subr.mxu0 0.0
    %619 = vmatpush1.msra.mxu0 %v380
    %620 = vmatprep.subr.mxu0 0.0
    %621 = vmatpush2.msra.mxu0 0.0
    %622 = vmatprep.subr.mxu0 0.0
    %623 = vmatpush2.msra.mxu0 0.0
    %624 = vmatprep.subr.mxu0 0.0
    %625 = vmatpush2.msra.mxu0 0.0
    %626 = vmatprep.subr.mxu0 0.0
    %627 = vmatpush2.msra.mxu0 0.0
    %628 = vmatprep.subr.mxu0 0.0
    %629 = vmatpush2.msra.mxu0 0.0
    %630 = vmatprep.subr.mxu0 0.0
    %631 = vmatpush2.msra.mxu0 0.0
    %632 = vmatprep.subr.mxu0 0.0
    %633 = vmatpush2.msra.mxu0 0.0
    %634 = vmatprep.subr.mxu0 0.0
    %635 = vmatpush2.msra.mxu0 0.0
    %636 = vmatprep.subr.mxu0 0.0
    %637 = vmatpush2.msra.mxu0 0.0
    %638 = vmatprep.subr.mxu0 0.0
    %639 = vmatpush2.msra.mxu0 0.0
    %640 = vmatprep.subr.mxu0 0.0
    %641 = vmatpush2.msra.mxu0 0.0
    %642 = vmatprep.subr.mxu0 0.0
    %643 = vmatpush2.msra.mxu0 0.0
    %644 = vmatprep.subr.mxu0 0.0
    %645 = vmatpush2.msra.mxu0 0.0
    %646 = vmatprep.subr.mxu0 0.0
    %647 = vmatpush2.msra.mxu0 0.0
    %648 = vmatprep.subr.mxu0 0.0
    %649 = vmatpush2.msra.mxu0 0.0
    %650 = vmatprep.subr.mxu0 0.0
    %651 = vmatpush2.msra.mxu0 0.0
    %652 = vmatprep.mubr.f32.mxu0 0.0
    %653 = vmatmul.mubr.f32.gmra.mxu0 %v580
    %v654 = vpop.f32.mrf.mxu0
    %v655 = vadd.f32 0.0, %v654
    %v656 = vpop.f32.mrf.mxu0
    %657 = vmatprep.mubr.f32.mxu0 0.0
    %658 = vmatmul.mubr.f32.gmra.mxu0 %v583
    %v659 = vpop.f32.mrf.mxu0
    %v660 = vadd.f32 0.0, %v659
    %v661 = vpop.f32.mrf.mxu0
    %662 = vdwg.mxu0
    %v663 = vsub.f32 %v92, %v372
    %v664 = vsub.f32 %v93, %v655
    %v665 = vmul.f32 %v663, %v663
    %v666 = vsel %vm97, %v665, 0.0
    %667 = vadd.xlane.f32.xlu0 %v666
    %v668 = vpop.xlane.xlu0 %667
    %v669 = vrot.slane %v668, 4
    %v670 = vadd.f32 %v668, %v669
    %v671 = vrot.slane %v670, 2
    %v672 = vadd.f32 %v670, %v671
    %v673 = vrot.slane %v672, 1
    %v674 = vadd.f32 %v672, %v673
    %s675 = vtos %v674
    %v676 = vmul.f32 %v664, %v664
    %v677 = vsel %vm97, %v676, 0.0
    %678 = vadd.xlane.f32.xlu0 %v677
    %v679 = vpop.xlane.xlu0 %678
    %v680 = vrot.slane %v679, 4
    %v681 = vadd.f32 %v679, %v680
    %v682 = vrot.slane %v681, 2
    %v683 = vadd.f32 %v681, %v682
    %v684 = vrot.slane %v683, 1
    %v685 = vadd.f32 %v683, %v684
    %s686 = vtos %v685
    %s687 = sadd.f32 %s675, %s686
    %s688 = smul.f32 %s687, 0.0048828125
    %s689 = scalar_lea.smem [#allocation15], 0
    %690 = sst [smem:[%s689]] %s688
    %691 = vst.msk [vmem:[%s6] sm:$0xff] %vm97, %v372
    %692 = vst.msk [vmem:[%s6 + $0x8] sm:$0xff] %vm97, %v377
    %693 = vst.msk [vmem:[%s6 + $0x10] sm:$0xff] %vm97, %v655
    %694 = vst.msk [vmem:[%s6 + $0x18] sm:$0xff] %vm97, %v660
    %695 = vst.msk [vmem:[#allocation12] sm:$0xff] %vm267, %v298
    %696 = vst.msk [vmem:[#allocation13] sm:$0xff] %vm547, %v578
    // Predicated region
    $region46: #{dual_vq_forward.1} parent=1 // pred_check
      _
    $region47: #{dual_vq_forward.1} parent=1 // pred_check_branch
      %698 = sbr.rel (0) target = $region49
    $region48: #{dual_vq_forward.1} parent=1 // pred_region
      _
    $region49: #{dual_vq_forward.1} parent=1 // pred_fallthru
      _
    // Predicated region
    $region50: #{dual_vq_forward.1} parent=1 // pred_check
      _
    $region51: #{dual_vq_forward.1} parent=1 // pred_check_branch
      %700 = sbr.rel (0) target = $region53
    $region52: #{dual_vq_forward.1} parent=1 // pred_region
      %s702 = ssub.s32 128, 128
      %703 = vsyncadd [#allocation4], %s702
      %s705 = sshll.u32 [#allocation12], 4
      %s706 = int_to_ptr.vmem [resolvable:$true] %s705
      %708 = dma.vmem_to_hbm [thread:$0]  %s706, 128, %s7, [#allocation4]
    $region53: #{dual_vq_forward.1} parent=1 // pred_fallthru
      _
    // Predicated region
    $region54: #{dual_vq_forward.1} parent=1 // pred_check
      _
    $region55: #{dual_vq_forward.1} parent=1 // pred_check_branch
      %710 = sbr.rel (0) target = $region57
    $region56: #{dual_vq_forward.1} parent=1 // pred_region
      %s712 = ssub.s32 128, 128
      %713 = vsyncadd [#allocation14], %s712
      %s715 = sshll.u32 [#allocation13], 4
      %s716 = int_to_ptr.vmem [resolvable:$true] %s715
      %718 = dma.vmem_to_hbm [thread:$0]  %s716, 128, %s8, [#allocation14]
    $region57: #{dual_vq_forward.1} parent=1 // pred_fallthru
      _
    // Predicated region
    $region58: #{dual_vq_forward.1} parent=1 // pred_check
      _
    $region59: #{dual_vq_forward.1} parent=1 // pred_check_branch
      %720 = sbr.rel (0) target = $region61
    $region60: #{dual_vq_forward.1} parent=1 // pred_region
      %s722 = ssub.s32 16, 16
      %723 = vsyncadd [#allocation5], %s722
      %726 = dma.smem_to_hbm [#allocation15], 16, %s9, [#allocation5]
    $region61: #{dual_vq_forward.1} parent=1 // pred_fallthru
      _
    // Predicated region
    $region62: #{dual_vq_forward.1} parent=1 // pred_check
      _
    $region63: #{dual_vq_forward.1} parent=1 // pred_check_branch
      %728 = sbr.rel (0) target = $region65
    $region64: #{dual_vq_forward.1} parent=1 // pred_region
      _
    $region65: #{dual_vq_forward.1} parent=1 // pred_fallthru
      _
    // Predicated region
    $region66: #{dual_vq_forward.1} parent=1 // pred_check
      _
    $region67: #{dual_vq_forward.1} parent=1 // pred_check_branch
      %730 = sbr.rel (0) target = $region69
    $region68: #{dual_vq_forward.1} parent=1 // pred_region
      %731 = dma.done [#allocation4], 128
    $region69: #{dual_vq_forward.1} parent=1 // pred_fallthru
      _
    // Predicated region
    $region70: #{dual_vq_forward.1} parent=1 // pred_check
      _
    $region71: #{dual_vq_forward.1} parent=1 // pred_check_branch
      %733 = sbr.rel (0) target = $region73
    $region72: #{dual_vq_forward.1} parent=1 // pred_region
      %734 = dma.done [#allocation14], 128
    $region73: #{dual_vq_forward.1} parent=1 // pred_fallthru
      _
    // Predicated region
    $region74: #{dual_vq_forward.1} parent=1 // pred_check
      _
    $region75: #{dual_vq_forward.1} parent=1 // pred_check_branch
      %736 = sbr.rel (0) target = $region77
    $region76: #{dual_vq_forward.1} parent=1 // pred_region
      %737 = dma.done [#allocation5], 16
    $region77: #{dual_vq_forward.1} parent=1 // pred_fallthru
      _
    %738 = sfence
    %739 = vsyncpa [#allocation3], 1
    %740 = vsyncpa [#allocation7], 1
    %741 = vsyncpa [#allocation10], 1
    %742 = vsyncpa [#allocation4], 1
    %743 = vsyncpa [#allocation14], 1
    %744 = vsyncpa [#allocation5], 1

</llo_original>
